<compile_context>
chip_gen: v5e
topology: v5e:2x2
jax: 0.10.0
libtpu: 0.0.40
codegen_flags: <defaults>
</compile_context>

<pallas_src>
import functools

import jax
import jax.numpy as jnp
import numpy as np
from jax.experimental import pallas as pl
from jax.experimental.pallas import tpu as pltpu

LANE = 128


def _round_up(x, m):
    return (x + m - 1) // m * m


def _mag_kernel(beta_shift, ln_eps, inv_dt, dt_p, mm_dtype, recip_approx,
                text_ref, vis_ref, aco_ref,
                w_txt_ref, w_vis_ref, w_aco_ref,
                vecs_ref, out_ref):
    # Activations are cast to the matmul dtype in-kernel (no extra HBM pass);
    # accumulation is forced to f32 via preferred_element_type.
    text_in = text_ref[...]
    text_mm = text_in.astype(mm_dtype)
    vis_mm = vis_ref[...].astype(mm_dtype)
    aco_mm = aco_ref[...].astype(mm_dtype)

    # Fused matmuls: each LHS hits the MXU once with a 2*Dt_p-wide fused RHS.
    #   txt_out = text @ [W_hv_txt | W_ha_txt]
    #   vis_out = vis  @ [W_hv_vis | W_v     ]
    #   aco_out = aco  @ [W_ha_aco | W_a     ]
    txt_out = jnp.dot(text_mm, w_txt_ref[...], preferred_element_type=jnp.float32)
    vis_out = jnp.dot(vis_mm, w_vis_ref[...], preferred_element_type=jnp.float32)
    aco_out = jnp.dot(aco_mm, w_aco_ref[...], preferred_element_type=jnp.float32)

    # Packed row vectors: [b_hv, b_ha, b_v, b_a, gamma, beta, 0, 0] (f32).
    vecs = vecs_ref[...]
    b_hv, b_ha = vecs[0:1, :], vecs[1:2, :]
    b_v, b_a = vecs[2:3, :], vecs[3:4, :]
    gamma, beta = vecs[4:5, :], vecs[5:6, :]

    # Column slices land on 128-aligned offsets (dt_p is a lane multiple).
    weight_v = jnp.maximum(vis_out[:, :dt_p] + txt_out[:, :dt_p] + b_hv, 0.0)
    weight_a = jnp.maximum(aco_out[:, :dt_p] + txt_out[:, dt_p:] + b_ha, 0.0)
    h_m = weight_v * (vis_out[:, dt_p:] + b_v)
    h_m = h_m + weight_a * (aco_out[:, dt_p:] + b_a)

    # Norms over the feature axis. Padded lanes are zero in both text and
    # h_m, so full-lane reductions give the true L2 norms.
    text_f = text_in.astype(jnp.float32)
    eps = 1e-6
    em_norm = jnp.sqrt(jnp.sum(text_f * text_f, axis=-1, keepdims=True))
    hm_norm = jnp.sqrt(jnp.sum(h_m * h_m, axis=-1, keepdims=True))
    hm_norm = jnp.where(hm_norm == 0.0, 1.0, hm_norm)
    denom = hm_norm + eps
    if recip_approx:
        thresh = em_norm * pl.reciprocal(denom, approx=True) * beta_shift
    else:
        thresh = em_norm / denom * beta_shift
    alpha = jnp.minimum(thresh, 1.0)

    x = alpha * h_m + text_f

    # Single-pass LayerNorm statistics over the TRUE feature width (padded
    # lanes of x are exactly zero, so the sums are exact; divide by true Dt).
    s1 = jnp.sum(x, axis=-1, keepdims=True)
    s2 = jnp.sum(x * x, axis=-1, keepdims=True)
    mean = s1 * inv_dt
    var = s2 * inv_dt - mean * mean
    y = (x - mean) * jax.lax.rsqrt(var + ln_eps)
    y = y * gamma + beta

    # TODO(synk): nn.Dropout is identity in eval mode; training-mode dropout omitted.
    out_ref[...] = y.astype(out_ref.dtype)


def _pad2(x, rows, cols):
    r, c = x.shape
    if (r, c) == (rows, cols):
        return x
    return jnp.pad(x, ((0, rows - r), (0, cols - c)))


def prepare_mag_params(params, compute_dtype=jnp.bfloat16):
    """One-time parameter preparation (hoisted out of the forward call):
    split the concat weights, pad to lane-aligned shapes, fuse the per-LHS
    weight pairs along the output axis, cast matmul weights to the compute
    dtype, and pack the six (1, Dt) vectors into one (8, Dt_p) block."""
    w_v, w_a = params["w_v"], params["w_a"]
    Dv, Dt = w_v.shape
    Da = w_a.shape[0]
    Dt_p, Dv_p, Da_p = (_round_up(d, LANE) for d in (Dt, Dv, Da))

    w_hv, w_ha = params["w_hv"], params["w_ha"]
    w_txt = jnp.concatenate([_pad2(w_hv[Dv:, :], Dt_p, Dt_p),
                             _pad2(w_ha[Da:, :], Dt_p, Dt_p)], axis=1)
    w_vis = jnp.concatenate([_pad2(w_hv[:Dv, :], Dv_p, Dt_p),
                             _pad2(w_v, Dv_p, Dt_p)], axis=1)
    w_aco = jnp.concatenate([_pad2(w_ha[:Da, :], Da_p, Dt_p),
                             _pad2(w_a, Da_p, Dt_p)], axis=1)

    vecs = jnp.concatenate(
        [_pad2(params[k].astype(jnp.float32), 1, Dt_p)
         for k in ("b_hv", "b_ha", "b_v", "b_a", "ln_gamma", "ln_beta")],
        axis=0)
    vecs = _pad2(vecs, 8, Dt_p)

    return {
        "w_txt": w_txt.astype(compute_dtype),   # (Dt_p, 2*Dt_p)
        "w_vis": w_vis.astype(compute_dtype),   # (Dv_p, 2*Dt_p)
        "w_aco": w_aco.astype(compute_dtype),   # (Da_p, 2*Dt_p)
        "vecs": vecs,                            # (8, Dt_p) f32
    }


def mag_forward(text, visual, acoustic, prepared, beta_shift, *, tm=512):
    """text: (B,S,Dt), visual: (B,S,Dv), acoustic: (B,S,Da) -> (B,S,Dt)."""
    B, S, Dt = text.shape
    Dv = visual.shape[-1]
    Da = acoustic.shape[-1]
    N = B * S
    Dt_p, Dv_p, Da_p = (_round_up(d, LANE) for d in (Dt, Dv, Da))
    assert prepared["w_txt"].shape == (Dt_p, 2 * Dt_p)
    assert prepared["w_vis"].shape == (Dv_p, 2 * Dt_p)
    assert prepared["w_aco"].shape == (Da_p, 2 * Dt_p)

    # Rows only need sublane (8) alignment; the pad is a no-op when N % 8 == 0.
    N8 = _round_up(N, 8)

    # Row tile: large for HBM pipelining, but aim for >= 4 grid steps when
    # there is enough work so both v7x TensorCores get >= 2 pipelined steps
    # each (also keeps prefetch/writeback overlapped on v5e/v6e).
    tm_eff = min(_round_up(tm, 8), N8)
    if N8 >= 32 and pl.cdiv(N8, tm_eff) < 4:
        tm_eff = max(8, _round_up(pl.cdiv(N8, 4), 8))
    grid = pl.cdiv(N8, tm_eff)

    # Lane/row padding is skipped entirely when shapes are already aligned
    # (e.g. Dt = 768/1024, N % 8 == 0): no extra HBM pass over activations.
    text2 = _pad2(text.reshape(N, Dt), N8, Dt_p)
    vis2 = _pad2(visual.reshape(N, Dv), N8, Dv_p)
    aco2 = _pad2(acoustic.reshape(N, Da), N8, Da_p)

    # Footprint-derived VMEM limit (double-buffered tiles + resident weights
    # + an estimate for f32 epilogue temporaries), clamped to be v7x-safe.
    act_b = text2.dtype.itemsize
    w_b = prepared["w_txt"].dtype.itemsize
    tile_bytes = tm_eff * ((Dt_p + Dv_p + Da_p) * act_b + Dt_p * text.dtype.itemsize)
    weight_bytes = (Dt_p + Dv_p + Da_p) * 2 * Dt_p * w_b + 8 * Dt_p * 4
    interm_bytes = 8 * tm_eff * 2 * Dt_p * 4
    vmem_limit = 2 * (tile_bytes + weight_bytes) + interm_bytes + (4 << 20)
    vmem_limit = int(min(max(vmem_limit, 16 << 20), 64 << 20))

    mm_dtype = prepared["w_txt"].dtype
    recip_approx = mm_dtype != jnp.float32
    kernel = functools.partial(
        _mag_kernel, float(beta_shift), 1e-5, 1.0 / float(Dt), Dt_p, mm_dtype,
        recip_approx)

    # Grid-invariant operands use index_map -> (0, 0); Pallas keeps them
    # resident instead of re-fetching each step.
    # TODO(synk): pipeline_mode=pl.Buffered(1) on the invariant weight specs
    # would halve their VMEM residency; left at the default double buffer.
    out2 = pl.pallas_call(
        kernel,
        out_shape=jax.ShapeDtypeStruct((N8, Dt_p), text.dtype),
        grid_spec=pltpu.PrefetchScalarGridSpec(
            num_scalar_prefetch=0,
            grid=(grid,),
            in_specs=[
                pl.BlockSpec((tm_eff, Dt_p), lambda i: (i, 0)),   # text rows
                pl.BlockSpec((tm_eff, Dv_p), lambda i: (i, 0)),   # visual rows
                pl.BlockSpec((tm_eff, Da_p), lambda i: (i, 0)),   # acoustic rows
                pl.BlockSpec((Dt_p, 2 * Dt_p), lambda i: (0, 0)),  # fused text weights
                pl.BlockSpec((Dv_p, 2 * Dt_p), lambda i: (0, 0)),  # fused visual weights
                pl.BlockSpec((Da_p, 2 * Dt_p), lambda i: (0, 0)),  # fused acoustic weights
                pl.BlockSpec((8, Dt_p), lambda i: (0, 0)),         # packed biases + LN params
            ],
            out_specs=pl.BlockSpec((tm_eff, Dt_p), lambda i: (i, 0)),
        ),
        compiler_params=pltpu.CompilerParams(
            dimension_semantics=("parallel",),
            vmem_limit_bytes=vmem_limit,
        ),
    )(text2, vis2, aco2,
      prepared["w_txt"], prepared["w_vis"], prepared["w_aco"], prepared["vecs"])
    return out2[:N, :Dt].reshape(B, S, Dt)


def mag_reference(text, visual, acoustic, params, beta_shift):
    """Pure-JAX reference matching the PyTorch forward (eval mode)."""
    eps = 1e-6
    cat_v = jnp.concatenate([visual, text], axis=-1)
    cat_a = jnp.concatenate([acoustic, text], axis=-1)
    weight_v = jax.nn.relu(cat_v @ params["w_hv"] + params["b_hv"][0])
    weight_a = jax.nn.relu(cat_a @ params["w_ha"] + params["b_ha"][0])
    h_m = weight_v * (visual @ params["w_v"] + params["b_v"][0]) \
        + weight_a * (acoustic @ params["w_a"] + params["b_a"][0])
    em_norm = jnp.linalg.norm(text, axis=-1)
    hm_norm = jnp.linalg.norm(h_m, axis=-1)
    hm_norm = jnp.where(hm_norm == 0.0, jnp.ones_like(hm_norm), hm_norm)
    thresh = em_norm / (hm_norm + eps) * beta_shift
    alpha = jnp.minimum(thresh, 1.0)[..., None]
    x = alpha * h_m + text
    mean = jnp.mean(x, axis=-1, keepdims=True)
    var = jnp.mean((x - mean) ** 2, axis=-1, keepdims=True)
    y = (x - mean) / jnp.sqrt(var + 1e-5)
    return y * params["ln_gamma"][0] + params["ln_beta"][0]


if __name__ == "__main__":
    # Small shapes consistent with the module: (batch, seq, feat_dim).
    B, S = 2, 8
    Dt, Dv, Da = 32, 16, 24          # text / video / audio feature dims
    beta_shift = 0.5

    key = jax.random.PRNGKey(0)
    ks = jax.random.split(key, 12)

    def init_w(k, fan_in, fan_out):
        # (in, out) layout so kernel uses x @ W directly (PyTorch Linear is x @ W.T + b).
        return (jax.random.normal(k, (fan_in, fan_out), jnp.float32)
                / np.sqrt(fan_in)).astype(jnp.float32)

    params = {
        "w_hv": init_w(ks[0], Dv + Dt, Dt),
        "b_hv": jax.random.normal(ks[1], (1, Dt), jnp.float32) * 0.02,
        "w_ha": init_w(ks[2], Da + Dt, Dt),
        "b_ha": jax.random.normal(ks[3], (1, Dt), jnp.float32) * 0.02,
        "w_v": init_w(ks[4], Dv, Dt),
        "b_v": jax.random.normal(ks[5], (1, Dt), jnp.float32) * 0.02,
        "w_a": init_w(ks[6], Da, Dt),
        "b_a": jax.random.normal(ks[7], (1, Dt), jnp.float32) * 0.02,
        "ln_gamma": jnp.ones((1, Dt), jnp.float32),
        "ln_beta": jnp.zeros((1, Dt), jnp.float32),
    }

    text = jax.random.normal(ks[8], (B, S, Dt), jnp.float32)
    visual = jax.random.normal(ks[9], (B, S, Dv), jnp.float32)
    acoustic = jax.random.normal(ks[10], (B, S, Da), jnp.float32)

    ref = mag_reference(text, visual, acoustic, params, beta_shift)

    # 1) f32-compute path: tight structural/numerical check against reference.
    prep_f32 = prepare_mag_params(params, compute_dtype=jnp.float32)
    out_f32 = jax.block_until_ready(
        mag_forward(text, visual, acoustic, prep_f32, beta_shift))
    np.testing.assert_allclose(np.asarray(out_f32), np.asarray(ref),
                               rtol=1e-4, atol=1e-4)

    # 2) Default bf16-MXU fast path: mixed-precision tolerance.
    prep_bf16 = prepare_mag_params(params)           # compute_dtype=bf16
    fwd = jax.jit(lambda t, v, a, p: mag_forward(t, v, a, p, beta_shift))
    out = jax.block_until_ready(fwd(text, visual, acoustic, prep_bf16))
    np.testing.assert_allclose(np.asarray(out), np.asarray(ref),
                               rtol=5e-2, atol=5e-2)

    print("KERNEL_OK")
</pallas_src>

<mosaic_0001>
module attributes {stable_mosaic.version = 11 : i64} {
  func.func @_mag_kernel(%arg0: i32, %arg1: memref<16x128xf32, #tpu.memory_space<vmem>>, %arg2: memref<16x128xf32, #tpu.memory_space<vmem>>, %arg3: memref<16x128xf32, #tpu.memory_space<vmem>>, %arg4: memref<128x256xf32, #tpu.memory_space<vmem>>, %arg5: memref<128x256xf32, #tpu.memory_space<vmem>>, %arg6: memref<128x256xf32, #tpu.memory_space<vmem>>, %arg7: memref<8x128xf32, #tpu.memory_space<vmem>>, %arg8: memref<16x128xf32, #tpu.memory_space<vmem>>) attributes {dimension_semantics = [#tpu.dimension_semantics<parallel>], iteration_bounds = array<i64: 1>, scalar_prefetch = 0 : i64, scratch_operands = 0 : i64, tpu.core_type = #tpu.core_type<tc>, window_params = [{transform_indices = @transform_0, window_bounds = array<i64: 16, 128>}, {transform_indices = @transform_1, window_bounds = array<i64: 16, 128>}, {transform_indices = @transform_2, window_bounds = array<i64: 16, 128>}, {pipeline_mode = #tpu.pipeline_mode<synchronous>, transform_indices = @transform_3, window_bounds = array<i64: 128, 256>}, {pipeline_mode = #tpu.pipeline_mode<synchronous>, transform_indices = @transform_4, window_bounds = array<i64: 128, 256>}, {pipeline_mode = #tpu.pipeline_mode<synchronous>, transform_indices = @transform_5, window_bounds = array<i64: 128, 256>}, {pipeline_mode = #tpu.pipeline_mode<synchronous>, transform_indices = @transform_6, window_bounds = array<i64: 8, 128>}, {transform_indices = @transform_7, window_bounds = array<i64: 16, 128>}]} {
    %c0 = arith.constant 0 : index
    %c0_0 = arith.constant 0 : index
    %0 = vector.load %arg1[%c0, %c0_0] : memref<16x128xf32, #tpu.memory_space<vmem>>, vector<16x128xf32>
    %c0_1 = arith.constant 0 : index
    %c0_2 = arith.constant 0 : index
    %1 = vector.load %arg2[%c0_1, %c0_2] : memref<16x128xf32, #tpu.memory_space<vmem>>, vector<16x128xf32>
    %c0_3 = arith.constant 0 : index
    %c0_4 = arith.constant 0 : index
    %2 = vector.load %arg3[%c0_3, %c0_4] : memref<16x128xf32, #tpu.memory_space<vmem>>, vector<16x128xf32>
    %c0_5 = arith.constant 0 : index
    %c0_6 = arith.constant 0 : index
    %3 = vector.load %arg4[%c0_5, %c0_6] : memref<128x256xf32, #tpu.memory_space<vmem>>, vector<128x256xf32>
    %cst = arith.constant dense<0.000000e+00> : vector<16x256xf32>
    %4 = tpu.matmul %0, %3, %cst {dimension_numbers = #tpu.dot_dimension_numbers<[1], [0], [0], [1], [0, 0, 1, 1], [], []>} : vector<16x128xf32>, vector<128x256xf32>, vector<16x256xf32> -> vector<16x256xf32>
    %c0_7 = arith.constant 0 : index
    %c0_8 = arith.constant 0 : index
    %5 = vector.load %arg5[%c0_7, %c0_8] : memref<128x256xf32, #tpu.memory_space<vmem>>, vector<128x256xf32>
    %cst_9 = arith.constant dense<0.000000e+00> : vector<16x256xf32>
    %6 = tpu.matmul %1, %5, %cst_9 {dimension_numbers = #tpu.dot_dimension_numbers<[1], [0], [0], [1], [0, 0, 1, 1], [], []>} : vector<16x128xf32>, vector<128x256xf32>, vector<16x256xf32> -> vector<16x256xf32>
    %c0_10 = arith.constant 0 : index
    %c0_11 = arith.constant 0 : index
    %7 = vector.load %arg6[%c0_10, %c0_11] : memref<128x256xf32, #tpu.memory_space<vmem>>, vector<128x256xf32>
    %cst_12 = arith.constant dense<0.000000e+00> : vector<16x256xf32>
    %8 = tpu.matmul %2, %7, %cst_12 {dimension_numbers = #tpu.dot_dimension_numbers<[1], [0], [0], [1], [0, 0, 1, 1], [], []>} : vector<16x128xf32>, vector<128x256xf32>, vector<16x256xf32> -> vector<16x256xf32>
    %c0_13 = arith.constant 0 : index
    %c0_14 = arith.constant 0 : index
    %9 = vector.load %arg7[%c0_13, %c0_14] : memref<8x128xf32, #tpu.memory_space<vmem>>, vector<8x128xf32>
    %10 = vector.extract_strided_slice %9 {offsets = [0, 0], sizes = [1, 128], strides = [1, 1]} : vector<8x128xf32> to vector<1x128xf32>
    %11 = vector.extract_strided_slice %9 {offsets = [1, 0], sizes = [1, 128], strides = [1, 1]} : vector<8x128xf32> to vector<1x128xf32>
    %12 = vector.extract_strided_slice %9 {offsets = [2, 0], sizes = [1, 128], strides = [1, 1]} : vector<8x128xf32> to vector<1x128xf32>
    %13 = vector.extract_strided_slice %9 {offsets = [3, 0], sizes = [1, 128], strides = [1, 1]} : vector<8x128xf32> to vector<1x128xf32>
    %14 = vector.extract_strided_slice %9 {offsets = [4, 0], sizes = [1, 128], strides = [1, 1]} : vector<8x128xf32> to vector<1x128xf32>
    %15 = vector.extract_strided_slice %9 {offsets = [5, 0], sizes = [1, 128], strides = [1, 1]} : vector<8x128xf32> to vector<1x128xf32>
    %16 = vector.extract_strided_slice %6 {offsets = [0, 0], sizes = [16, 128], strides = [1, 1]} : vector<16x256xf32> to vector<16x128xf32>
    %17 = vector.extract_strided_slice %4 {offsets = [0, 0], sizes = [16, 128], strides = [1, 1]} : vector<16x256xf32> to vector<16x128xf32>
    %18 = arith.addf %16, %17 : vector<16x128xf32>
    %19 = vector.broadcast %10 : vector<1x128xf32> to vector<16x128xf32>
    %20 = arith.addf %18, %19 : vector<16x128xf32>
    %cst_15 = arith.constant 0.000000e+00 : f32
    %21 = vector.broadcast %cst_15 : f32 to vector<16x128xf32>
    %22 = arith.maximumf %20, %21 : vector<16x128xf32>
    %23 = vector.extract_strided_slice %8 {offsets = [0, 0], sizes = [16, 128], strides = [1, 1]} : vector<16x256xf32> to vector<16x128xf32>
    %24 = vector.extract_strided_slice %4 {offsets = [0, 128], sizes = [16, 128], strides = [1, 1]} : vector<16x256xf32> to vector<16x128xf32>
    %25 = arith.addf %23, %24 : vector<16x128xf32>
    %26 = vector.broadcast %11 : vector<1x128xf32> to vector<16x128xf32>
    %27 = arith.addf %25, %26 : vector<16x128xf32>
    %cst_16 = arith.constant 0.000000e+00 : f32
    %28 = vector.broadcast %cst_16 : f32 to vector<16x128xf32>
    %29 = arith.maximumf %27, %28 : vector<16x128xf32>
    %30 = vector.extract_strided_slice %6 {offsets = [0, 128], sizes = [16, 128], strides = [1, 1]} : vector<16x256xf32> to vector<16x128xf32>
    %31 = vector.broadcast %12 : vector<1x128xf32> to vector<16x128xf32>
    %32 = arith.addf %30, %31 : vector<16x128xf32>
    %33 = arith.mulf %22, %32 : vector<16x128xf32>
    %34 = vector.extract_strided_slice %8 {offsets = [0, 128], sizes = [16, 128], strides = [1, 1]} : vector<16x256xf32> to vector<16x128xf32>
    %35 = vector.broadcast %13 : vector<1x128xf32> to vector<16x128xf32>
    %36 = arith.addf %34, %35 : vector<16x128xf32>
    %37 = arith.mulf %29, %36 : vector<16x128xf32>
    %38 = arith.addf %33, %37 : vector<16x128xf32>
    %39 = arith.mulf %0, %0 : vector<16x128xf32>
    %cst_17 = arith.constant dense<0.000000e+00> : vector<16xf32>
    %40 = vector.multi_reduction <add>, %39, %cst_17 [1] : vector<16x128xf32> to vector<16xf32>
    %41 = vector.shape_cast %40 : vector<16xf32> to vector<16x1xf32>
    %42 = math.sqrt %41 : vector<16x1xf32>
    %43 = arith.mulf %38, %38 : vector<16x128xf32>
    %cst_18 = arith.constant dense<0.000000e+00> : vector<16xf32>
    %44 = vector.multi_reduction <add>, %43, %cst_18 [1] : vector<16x128xf32> to vector<16xf32>
    %45 = vector.shape_cast %44 : vector<16xf32> to vector<16x1xf32>
    %46 = math.sqrt %45 : vector<16x1xf32>
    %cst_19 = arith.constant 0.000000e+00 : f32
    %47 = vector.broadcast %cst_19 : f32 to vector<16x1xf32>
    %48 = arith.cmpf oeq, %46, %47 : vector<16x1xf32>
    %cst_20 = arith.constant 1.000000e+00 : f32
    %49 = vector.broadcast %cst_20 : f32 to vector<16x1xf32>
    %50 = arith.select %48, %49, %46 : vector<16x1xi1>, vector<16x1xf32>
    %cst_21 = arith.constant 9.99999997E-7 : f32
    %51 = vector.broadcast %cst_21 : f32 to vector<16x1xf32>
    %52 = arith.addf %50, %51 : vector<16x1xf32>
    %53 = arith.divf %42, %52 : vector<16x1xf32>
    %cst_22 = arith.constant 5.000000e-01 : f32
    %54 = vector.broadcast %cst_22 : f32 to vector<16x1xf32>
    %55 = arith.mulf %53, %54 : vector<16x1xf32>
    %cst_23 = arith.constant 1.000000e+00 : f32
    %56 = vector.broadcast %cst_23 : f32 to vector<16x1xf32>
    %57 = arith.minimumf %55, %56 : vector<16x1xf32>
    %58 = vector.broadcast %57 : vector<16x1xf32> to vector<16x128xf32>
    %59 = arith.mulf %58, %38 : vector<16x128xf32>
    %60 = arith.addf %59, %0 : vector<16x128xf32>
    %cst_24 = arith.constant dense<0.000000e+00> : vector<16xf32>
    %61 = vector.multi_reduction <add>, %60, %cst_24 [1] : vector<16x128xf32> to vector<16xf32>
    %62 = vector.shape_cast %61 : vector<16xf32> to vector<16x1xf32>
    %63 = arith.mulf %60, %60 : vector<16x128xf32>
    %cst_25 = arith.constant dense<0.000000e+00> : vector<16xf32>
    %64 = vector.multi_reduction <add>, %63, %cst_25 [1] : vector<16x128xf32> to vector<16xf32>
    %65 = vector.shape_cast %64 : vector<16xf32> to vector<16x1xf32>
    %cst_26 = arith.constant 3.125000e-02 : f32
    %66 = vector.broadcast %cst_26 : f32 to vector<16x1xf32>
    %67 = arith.mulf %62, %66 : vector<16x1xf32>
    %cst_27 = arith.constant 3.125000e-02 : f32
    %68 = vector.broadcast %cst_27 : f32 to vector<16x1xf32>
    %69 = arith.mulf %65, %68 : vector<16x1xf32>
    %70 = arith.mulf %67, %67 : vector<16x1xf32>
    %71 = arith.subf %69, %70 : vector<16x1xf32>
    %72 = vector.broadcast %67 : vector<16x1xf32> to vector<16x128xf32>
    %73 = arith.subf %60, %72 : vector<16x128xf32>
    %cst_28 = arith.constant 9.99999974E-6 : f32
    %74 = vector.broadcast %cst_28 : f32 to vector<16x1xf32>
    %75 = arith.addf %71, %74 : vector<16x1xf32>
    %76 = math.rsqrt %75 : vector<16x1xf32>
    %77 = vector.broadcast %76 : vector<16x1xf32> to vector<16x128xf32>
    %78 = arith.mulf %73, %77 : vector<16x128xf32>
    %79 = vector.broadcast %14 : vector<1x128xf32> to vector<16x128xf32>
    %80 = arith.mulf %78, %79 : vector<16x128xf32>
    %81 = vector.broadcast %15 : vector<1x128xf32> to vector<16x128xf32>
    %82 = arith.addf %80, %81 : vector<16x128xf32>
    %c0_29 = arith.constant 0 : index
    %c0_30 = arith.constant 0 : index
    %83 = vector.load %arg8[%c0_29, %c0_30] : memref<16x128xf32, #tpu.memory_space<vmem>>, vector<16x128xf32>
    tpu.vector_store %arg8[%c0_29, %c0_30], %82 {strides = array<i32>} : memref<16x128xf32, #tpu.memory_space<vmem>>, vector<16x128xf32>,
    return
  }
  func.func @transform_0(%arg0: i32) -> (i32, i32) {
    %c0_i32 = arith.constant 0 : i32
    %c0_i32_0 = arith.constant 0 : i32
    return %arg0, %c0_i32 : i32, i32
  }
  func.func @transform_1(%arg0: i32) -> (i32, i32) {
    %c0_i32 = arith.constant 0 : i32
    %c0_i32_0 = arith.constant 0 : i32
    return %arg0, %c0_i32 : i32, i32
  }
  func.func @transform_2(%arg0: i32) -> (i32, i32) {
    %c0_i32 = arith.constant 0 : i32
    %c0_i32_0 = arith.constant 0 : i32
    return %arg0, %c0_i32 : i32, i32
  }
  func.func @transform_3(%arg0: i32) -> (i32, i32) {
    %c0_i32 = arith.constant 0 : i32
    %c0_i32_0 = arith.constant 0 : i32
    %c0_i32_1 = arith.constant 0 : i32
    return %c0_i32, %c0_i32_0 : i32, i32
  }
  func.func @transform_4(%arg0: i32) -> (i32, i32) {
    %c0_i32 = arith.constant 0 : i32
    %c0_i32_0 = arith.constant 0 : i32
    %c0_i32_1 = arith.constant 0 : i32
    return %c0_i32, %c0_i32_0 : i32, i32
  }
  func.func @transform_5(%arg0: i32) -> (i32, i32) {
    %c0_i32 = arith.constant 0 : i32
    %c0_i32_0 = arith.constant 0 : i32
    %c0_i32_1 = arith.constant 0 : i32
    return %c0_i32, %c0_i32_0 : i32, i32
  }
  func.func @transform_6(%arg0: i32) -> (i32, i32) {
    %c0_i32 = arith.constant 0 : i32
    %c0_i32_0 = arith.constant 0 : i32
    %c0_i32_1 = arith.constant 0 : i32
    return %c0_i32, %c0_i32_0 : i32, i32
  }
  func.func @transform_7(%arg0: i32) -> (i32, i32) {
    %c0_i32 = arith.constant 0 : i32
    %c0_i32_0 = arith.constant 0 : i32
    return %arg0, %c0_i32 : i32, i32
  }
}

</mosaic_0001>

<llo_original>
// kernel: tpu_custom_call.1
$region0: #{tpu_custom_call.1}
  #allocation0 [shape = 'u32[]', space=smem, size = 0x4, offset = 0x4, fixed_abs, tag = 'smem constant byte address 0x4 - core index']
  #allocation1 [shape = 'u32[72,128]{1,0:T(1,128)}', space=vmem, size = 0x9000, scoped, tag = 'internal scratch']
  %s0 = inlined_call_operand.hbm [shape: f32[16,128], index: 0, kind: input, shape index: {}]
  %s1 = inlined_call_operand.hbm [shape: f32[16,128], index: 1, kind: input, shape index: {}]
  %s2 = inlined_call_operand.hbm [shape: f32[16,128], index: 2, kind: input, shape index: {}]
  %s3 = inlined_call_operand.hbm [shape: f32[128,256], index: 3, kind: input, shape index: {}]
  %s4 = inlined_call_operand.hbm [shape: f32[128,256], index: 4, kind: input, shape index: {}]
  %s5 = inlined_call_operand.hbm [shape: f32[128,256], index: 5, kind: input, shape index: {}]
  %s6 = inlined_call_operand.hbm [shape: f32[8,128], index: 6, kind: input, shape index: {}]
  %s7 = inlined_call_operand.hbm [shape: f32[16,128], index: 7, kind: output, shape index: {}]
  %s8 = sld [smem:[#allocation0]]
  $region66: #{tpu_custom_call.1} parent=0
    _
  %s10 = ssub.s32 1, %s8
  %s11 = scalar_select 0, %s10, %s8
  $region1: #{tpu_custom_call.1} parent=0
    #allocation2 [shape = 'u8[8192]{0}', space=vmem, size = 0x2000, scoped, tag = 'input window, operand 0, single buffered']
    #allocation3 [shape = 's32[1]{0}', space=sflag, size = 0x4, scoped, tag = 'scoped memory for tpu_custom_call.1']
    #allocation4 [shape = 's32[1]{0}', space=sflag, size = 0x4, scoped, tag = 'scoped memory for tpu_custom_call.1']
    #allocation5 [shape = 'u8[8192]{0}', space=vmem, size = 0x2000, scoped, tag = 'input window, operand 1, single buffered']
    #allocation6 [shape = 's32[1]{0}', space=sflag, size = 0x4, scoped, tag = 'scoped memory for tpu_custom_call.1']
    #allocation7 [shape = 'u8[8192]{0}', space=vmem, size = 0x2000, scoped, tag = 'input window, operand 2, single buffered']
    #allocation8 [shape = 'u8[131072]{0}', space=vmem, size = 0x20000, scoped, tag = 'input window, operand 3, single buffered']
    #allocation9 [shape = 's32[1]{0}', space=sflag, size = 0x4, scoped, tag = 'scoped memory for tpu_custom_call.1']
    #allocation10 [shape = 'u8[131072]{0}', space=vmem, size = 0x20000, scoped, tag = 'input window, operand 4, single buffered']
    #allocation11 [shape = 'u8[131072]{0}', space=vmem, size = 0x20000, scoped, tag = 'input window, operand 5, single buffered']
    #allocation12 [shape = 's32[1]{0}', space=sflag, size = 0x4, scoped, tag = 'scoped memory for tpu_custom_call.1']
    #allocation13 [shape = 'u8[4096]{0}', space=vmem, size = 0x1000, scoped, tag = 'input window, operand 6, single buffered']
    #allocation14 [shape = 'u8[8192]{0}', space=vmem, size = 0x2000, scoped, tag = 'output window, operand 0, single buffered']
    %12 = vsyncpa [#allocation3], 0
    %13 = vsyncpa [#allocation6], 0
    %14 = vsyncpa [#allocation9], 0
    %15 = vsyncpa [#allocation12], 0
    %16 = vsyncpa [#allocation4], 0
    // Predicated region
    $region2: #{tpu_custom_call.1} parent=1 // pred_check
      _
    $region3: #{tpu_custom_call.1} parent=1 // pred_check_branch
      %18 = sbr.rel (0) target = $region5
    $region4: #{tpu_custom_call.1} parent=1 // pred_region
      %20 = vsyncadd [#allocation3], 0
      %s21 = sshll.u32 %s0, 4
      %s22 = int_to_ptr.hbm [resolvable:$true] %s21
      %s23 = sshll.u32 [#allocation2], 4
      %s24 = int_to_ptr.vmem [resolvable:$true] %s23
      %29 = dma.hbm_to_vmem [thread:$0]  %s22, 256, %s24, [#allocation3], 128, 128, 8
    $region5: #{tpu_custom_call.1} parent=1 // pred_fallthru
      _
    // Predicated region
    $region6: #{tpu_custom_call.1} parent=1 // pred_check
      _
    $region7: #{tpu_custom_call.1} parent=1 // pred_check_branch
      %31 = sbr.rel (0) target = $region9
    $region8: #{tpu_custom_call.1} parent=1 // pred_region
      %33 = vsyncadd [#allocation6], 0
      %s34 = sshll.u32 %s1, 4
      %s35 = int_to_ptr.hbm [resolvable:$true] %s34
      %s36 = sshll.u32 [#allocation5], 4
      %s37 = int_to_ptr.vmem [resolvable:$true] %s36
      %42 = dma.hbm_to_vmem [thread:$0]  %s35, 256, %s37, [#allocation6], 128, 128, 8
    $region9: #{tpu_custom_call.1} parent=1 // pred_fallthru
      _
    // Predicated region
    $region10: #{tpu_custom_call.1} parent=1 // pred_check
      _
    $region11: #{tpu_custom_call.1} parent=1 // pred_check_branch
      %44 = sbr.rel (0) target = $region13
    $region12: #{tpu_custom_call.1} parent=1 // pred_region
      %46 = vsyncadd [#allocation6], 0
      %s47 = sshll.u32 %s2, 4
      %s48 = int_to_ptr.hbm [resolvable:$true] %s47
      %s49 = sshll.u32 [#allocation7], 4
      %s50 = int_to_ptr.vmem [resolvable:$true] %s49
      %55 = dma.hbm_to_vmem [thread:$0]  %s48, 256, %s50, [#allocation6], 128, 128, 8
    $region13: #{tpu_custom_call.1} parent=1 // pred_fallthru
      _
    // Predicated region
    $region14: #{tpu_custom_call.1} parent=1 // pred_check
      _
    $region15: #{tpu_custom_call.1} parent=1 // pred_check_branch
      %57 = sbr.rel (0) target = $region17
    $region16: #{tpu_custom_call.1} parent=1 // pred_region
      %59 = vsyncadd [#allocation9], 0
      %s60 = sshll.u32 %s3, 4
      %s61 = int_to_ptr.hbm [resolvable:$true] %s60
      %s62 = sshll.u32 [#allocation8], 4
      %s63 = int_to_ptr.vmem [resolvable:$true] %s62
      %68 = dma.hbm_to_vmem [thread:$0]  %s61, 4096, %s63, [#allocation9], 256, 256, 16
    $region17: #{tpu_custom_call.1} parent=1 // pred_fallthru
      _
    // Predicated region
    $region18: #{tpu_custom_call.1} parent=1 // pred_check
      _
    $region19: #{tpu_custom_call.1} parent=1 // pred_check_branch
      %70 = sbr.rel (0) target = $region21
    $region20: #{tpu_custom_call.1} parent=1 // pred_region
      %72 = vsyncadd [#allocation9], 0
      %s73 = sshll.u32 %s4, 4
      %s74 = int_to_ptr.hbm [resolvable:$true] %s73
      %s75 = sshll.u32 [#allocation10], 4
      %s76 = int_to_ptr.vmem [resolvable:$true] %s75
      %81 = dma.hbm_to_vmem [thread:$0]  %s74, 4096, %s76, [#allocation9], 256, 256, 16
    $region21: #{tpu_custom_call.1} parent=1 // pred_fallthru
      _
    // Predicated region
    $region22: #{tpu_custom_call.1} parent=1 // pred_check
      _
    $region23: #{tpu_custom_call.1} parent=1 // pred_check_branch
      %83 = sbr.rel (0) target = $region25
    $region24: #{tpu_custom_call.1} parent=1 // pred_region
      %85 = vsyncadd [#allocation12], 0
      %s86 = sshll.u32 %s5, 4
      %s87 = int_to_ptr.hbm [resolvable:$true] %s86
      %s88 = sshll.u32 [#allocation11], 4
      %s89 = int_to_ptr.vmem [resolvable:$true] %s88
      %94 = dma.hbm_to_vmem [thread:$0]  %s87, 4096, %s89, [#allocation12], 256, 256, 16
    $region25: #{tpu_custom_call.1} parent=1 // pred_fallthru
      _
    // Predicated region
    $region26: #{tpu_custom_call.1} parent=1 // pred_check
      _
    $region27: #{tpu_custom_call.1} parent=1 // pred_check_branch
      %96 = sbr.rel (0) target = $region29
    $region28: #{tpu_custom_call.1} parent=1 // pred_region
      %98 = vsyncadd [#allocation12], 0
      %s100 = sshll.u32 %s6, 4
      %s101 = int_to_ptr.hbm [resolvable:$true] %s100
      %s102 = sshll.u32 [#allocation13], 4
      %s103 = int_to_ptr.vmem [resolvable:$true] %s102
      %105 = dma.hbm_to_vmem [thread:$0]  %s101, 128, %s103, [#allocation12]
    $region29: #{tpu_custom_call.1} parent=1 // pred_fallthru
      _
    // Predicated region
    $region30: #{tpu_custom_call.1} parent=1 // pred_check
      _
    $region31: #{tpu_custom_call.1} parent=1 // pred_check_branch
      %107 = sbr.rel (0) target = $region33
    $region32: #{tpu_custom_call.1} parent=1 // pred_region
      %109 = dma.done [#allocation3], 256
    $region33: #{tpu_custom_call.1} parent=1 // pred_fallthru
      _
    // Predicated region
    $region34: #{tpu_custom_call.1} parent=1 // pred_check
      _
    $region35: #{tpu_custom_call.1} parent=1 // pred_check_branch
      %111 = sbr.rel (0) target = $region37
    $region36: #{tpu_custom_call.1} parent=1 // pred_region
      %113 = dma.done [#allocation6], 256
    $region37: #{tpu_custom_call.1} parent=1 // pred_fallthru
      _
    // Predicated region
    $region38: #{tpu_custom_call.1} parent=1 // pred_check
      _
    $region39: #{tpu_custom_call.1} parent=1 // pred_check_branch
      %115 = sbr.rel (0) target = $region41
    $region40: #{tpu_custom_call.1} parent=1 // pred_region
      %117 = dma.done [#allocation6], 256
    $region41: #{tpu_custom_call.1} parent=1 // pred_fallthru
      _
    // Predicated region
    $region42: #{tpu_custom_call.1} parent=1 // pred_check
      _
    $region43: #{tpu_custom_call.1} parent=1 // pred_check_branch
      %119 = sbr.rel (0) target = $region45
    $region44: #{tpu_custom_call.1} parent=1 // pred_region
      %121 = dma.done [#allocation9], 4096
    $region45: #{tpu_custom_call.1} parent=1 // pred_fallthru
      _
    // Predicated region
    $region46: #{tpu_custom_call.1} parent=1 // pred_check
      _
    $region47: #{tpu_custom_call.1} parent=1 // pred_check_branch
      %123 = sbr.rel (0) target = $region49
    $region48: #{tpu_custom_call.1} parent=1 // pred_region
      %125 = dma.done [#allocation9], 4096
    $region49: #{tpu_custom_call.1} parent=1 // pred_fallthru
      _
    // Predicated region
    $region50: #{tpu_custom_call.1} parent=1 // pred_check
      _
    $region51: #{tpu_custom_call.1} parent=1 // pred_check_branch
      %127 = sbr.rel (0) target = $region53
    $region52: #{tpu_custom_call.1} parent=1 // pred_region
      %129 = dma.done [#allocation12], 4096
    $region53: #{tpu_custom_call.1} parent=1 // pred_fallthru
      _
    // Predicated region
    $region54: #{tpu_custom_call.1} parent=1 // pred_check
      _
    $region55: #{tpu_custom_call.1} parent=1 // pred_check_branch
      %131 = sbr.rel (0) target = $region57
    $region56: #{tpu_custom_call.1} parent=1 // pred_region
      %133 = dma.done [#allocation12], 128
    $region57: #{tpu_custom_call.1} parent=1 // pred_fallthru
      _
    %v134 = vld [vmem:[#allocation2] sm:$0xff]
    %v135 = vld [vmem:[#allocation2 + $0x8] sm:$0xff]
    %v136 = vld [vmem:[#allocation5] sm:$0xff]
    %v137 = vld [vmem:[#allocation5 + $0x8] sm:$0xff]
    %v138 = vld [vmem:[#allocation7] sm:$0xff]
    %v139 = vld [vmem:[#allocation7 + $0x8] sm:$0xff]
    %v140 = vld [vmem:[#allocation8] sm:$0xff]
    %v141 = vld [vmem:[#allocation8 + $0x8] sm:$0xff]
    %v142 = vld [vmem:[#allocation8 + $0x10] sm:$0xff]
    %v143 = vld [vmem:[#allocation8 + $0x18] sm:$0xff]
    %v144 = vld [vmem:[#allocation8 + $0x20] sm:$0xff]
    %v145 = vld [vmem:[#allocation8 + $0x28] sm:$0xff]
    %v146 = vld [vmem:[#allocation8 + $0x30] sm:$0xff]
    %v147 = vld [vmem:[#allocation8 + $0x38] sm:$0xff]
    %v148 = vld [vmem:[#allocation8 + $0x40] sm:$0xff]
    %v149 = vld [vmem:[#allocation8 + $0x48] sm:$0xff]
    %v150 = vld [vmem:[#allocation8 + $0x50] sm:$0xff]
    %v151 = vld [vmem:[#allocation8 + $0x58] sm:$0xff]
    %v152 = vld [vmem:[#allocation8 + $0x60] sm:$0xff]
    %v153 = vld [vmem:[#allocation8 + $0x68] sm:$0xff]
    %v154 = vld [vmem:[#allocation8 + $0x70] sm:$0xff]
    %v155 = vld [vmem:[#allocation8 + $0x78] sm:$0xff]
    %v156 = vld [vmem:[#allocation8 + $0x80] sm:$0xff]
    %v157 = vld [vmem:[#allocation8 + $0x88] sm:$0xff]
    %v158 = vld [vmem:[#allocation8 + $0x90] sm:$0xff]
    %v159 = vld [vmem:[#allocation8 + $0x98] sm:$0xff]
    %v160 = vld [vmem:[#allocation8 + $0xa0] sm:$0xff]
    %v161 = vld [vmem:[#allocation8 + $0xa8] sm:$0xff]
    %v162 = vld [vmem:[#allocation8 + $0xb0] sm:$0xff]
    %v163 = vld [vmem:[#allocation8 + $0xb8] sm:$0xff]
    %v164 = vld [vmem:[#allocation8 + $0xc0] sm:$0xff]
    %v165 = vld [vmem:[#allocation8 + $0xc8] sm:$0xff]
    %v166 = vld [vmem:[#allocation8 + $0xd0] sm:$0xff]
    %v167 = vld [vmem:[#allocation8 + $0xd8] sm:$0xff]
    %v168 = vld [vmem:[#allocation8 + $0xe0] sm:$0xff]
    %v169 = vld [vmem:[#allocation8 + $0xe8] sm:$0xff]
    %v170 = vld [vmem:[#allocation8 + $0xf0] sm:$0xff]
    %v171 = vld [vmem:[#allocation8 + $0xf8] sm:$0xff]
    %172 = vmatpush.msra.mxu0 %v170
    %173 = vmatpush.msra.mxu0 %v168
    %174 = vmatpush.msra.mxu0 %v166
    %175 = vmatpush.msra.mxu0 %v164
    %176 = vmatpush.msra.mxu0 %v162
    %177 = vmatpush.msra.mxu0 %v160
    %178 = vmatpush.msra.mxu0 %v158
    %179 = vmatpush.msra.mxu0 %v156
    %180 = vmatpush.msra.mxu0 %v154
    %181 = vmatpush.msra.mxu0 %v152
    %182 = vmatpush.msra.mxu0 %v150
    %183 = vmatpush.msra.mxu0 %v148
    %184 = vmatpush.msra.mxu0 %v146
    %185 = vmatpush.msra.mxu0 %v144
    %186 = vmatpush.msra.mxu0 %v142
    %187 = vmatpush.msra.mxu0 %v140
    %188 = vmatmul.f32.gmra.mxu0 %v134
    %v189 = vpop.f32.mrf.mxu0
    %v190 = vadd.f32 0.0, %v189
    %191 = vmatmul.f32.gmra.mxu0 %v135
    %v192 = vpop.f32.mrf.mxu0
    %v193 = vadd.f32 0.0, %v192
    %194 = vdwg.mxu0
    %195 = vmatpush.msra.mxu0 %v171
    %196 = vmatpush.msra.mxu0 %v169
    %197 = vmatpush.msra.mxu0 %v167
    %198 = vmatpush.msra.mxu0 %v165
    %199 = vmatpush.msra.mxu0 %v163
    %200 = vmatpush.msra.mxu0 %v161
    %201 = vmatpush.msra.mxu0 %v159
    %202 = vmatpush.msra.mxu0 %v157
    %203 = vmatpush.msra.mxu0 %v155
    %204 = vmatpush.msra.mxu0 %v153
    %205 = vmatpush.msra.mxu0 %v151
    %206 = vmatpush.msra.mxu0 %v149
    %207 = vmatpush.msra.mxu0 %v147
    %208 = vmatpush.msra.mxu0 %v145
    %209 = vmatpush.msra.mxu0 %v143
    %210 = vmatpush.msra.mxu0 %v141
    %211 = vmatmul.f32.gmra.mxu0 %v134
    %v212 = vpop.f32.mrf.mxu0
    %v213 = vadd.f32 0.0, %v212
    %214 = vmatmul.f32.gmra.mxu0 %v135
    %v215 = vpop.f32.mrf.mxu0
    %v216 = vadd.f32 0.0, %v215
    %217 = vdwg.mxu0
    %v218 = vld [vmem:[#allocation10] sm:$0xff]
    %v219 = vld [vmem:[#allocation10 + $0x8] sm:$0xff]
    %v220 = vld [vmem:[#allocation10 + $0x10] sm:$0xff]
    %v221 = vld [vmem:[#allocation10 + $0x18] sm:$0xff]
    %v222 = vld [vmem:[#allocation10 + $0x20] sm:$0xff]
    %v223 = vld [vmem:[#allocation10 + $0x28] sm:$0xff]
    %v224 = vld [vmem:[#allocation10 + $0x30] sm:$0xff]
    %v225 = vld [vmem:[#allocation10 + $0x38] sm:$0xff]
    %v226 = vld [vmem:[#allocation10 + $0x40] sm:$0xff]
    %v227 = vld [vmem:[#allocation10 + $0x48] sm:$0xff]
    %v228 = vld [vmem:[#allocation10 + $0x50] sm:$0xff]
    %v229 = vld [vmem:[#allocation10 + $0x58] sm:$0xff]
    %v230 = vld [vmem:[#allocation10 + $0x60] sm:$0xff]
    %v231 = vld [vmem:[#allocation10 + $0x68] sm:$0xff]
    %v232 = vld [vmem:[#allocation10 + $0x70] sm:$0xff]
    %v233 = vld [vmem:[#allocation10 + $0x78] sm:$0xff]
    %v234 = vld [vmem:[#allocation10 + $0x80] sm:$0xff]
    %v235 = vld [vmem:[#allocation10 + $0x88] sm:$0xff]
    %v236 = vld [vmem:[#allocation10 + $0x90] sm:$0xff]
    %v237 = vld [vmem:[#allocation10 + $0x98] sm:$0xff]
    %v238 = vld [vmem:[#allocation10 + $0xa0] sm:$0xff]
    %v239 = vld [vmem:[#allocation10 + $0xa8] sm:$0xff]
    %v240 = vld [vmem:[#allocation10 + $0xb0] sm:$0xff]
    %v241 = vld [vmem:[#allocation10 + $0xb8] sm:$0xff]
    %v242 = vld [vmem:[#allocation10 + $0xc0] sm:$0xff]
    %v243 = vld [vmem:[#allocation10 + $0xc8] sm:$0xff]
    %v244 = vld [vmem:[#allocation10 + $0xd0] sm:$0xff]
    %v245 = vld [vmem:[#allocation10 + $0xd8] sm:$0xff]
    %v246 = vld [vmem:[#allocation10 + $0xe0] sm:$0xff]
    %v247 = vld [vmem:[#allocation10 + $0xe8] sm:$0xff]
    %v248 = vld [vmem:[#allocation10 + $0xf0] sm:$0xff]
    %v249 = vld [vmem:[#allocation10 + $0xf8] sm:$0xff]
    %250 = vmatpush.msra.mxu0 %v248
    %251 = vmatpush.msra.mxu0 %v246
    %252 = vmatpush.msra.mxu0 %v244
    %253 = vmatpush.msra.mxu0 %v242
    %254 = vmatpush.msra.mxu0 %v240
    %255 = vmatpush.msra.mxu0 %v238
    %256 = vmatpush.msra.mxu0 %v236
    %257 = vmatpush.msra.mxu0 %v234
    %258 = vmatpush.msra.mxu0 %v232
    %259 = vmatpush.msra.mxu0 %v230
    %260 = vmatpush.msra.mxu0 %v228
    %261 = vmatpush.msra.mxu0 %v226
    %262 = vmatpush.msra.mxu0 %v224
    %263 = vmatpush.msra.mxu0 %v222
    %264 = vmatpush.msra.mxu0 %v220
    %265 = vmatpush.msra.mxu0 %v218
    %266 = vmatmul.f32.gmra.mxu0 %v136
    %v267 = vpop.f32.mrf.mxu0
    %v268 = vadd.f32 0.0, %v267
    %269 = vmatmul.f32.gmra.mxu0 %v137
    %v270 = vpop.f32.mrf.mxu0
    %v271 = vadd.f32 0.0, %v270
    %272 = vdwg.mxu0
    %273 = vmatpush.msra.mxu0 %v249
    %274 = vmatpush.msra.mxu0 %v247
    %275 = vmatpush.msra.mxu0 %v245
    %276 = vmatpush.msra.mxu0 %v243
    %277 = vmatpush.msra.mxu0 %v241
    %278 = vmatpush.msra.mxu0 %v239
    %279 = vmatpush.msra.mxu0 %v237
    %280 = vmatpush.msra.mxu0 %v235
    %281 = vmatpush.msra.mxu0 %v233
    %282 = vmatpush.msra.mxu0 %v231
    %283 = vmatpush.msra.mxu0 %v229
    %284 = vmatpush.msra.mxu0 %v227
    %285 = vmatpush.msra.mxu0 %v225
    %286 = vmatpush.msra.mxu0 %v223
    %287 = vmatpush.msra.mxu0 %v221
    %288 = vmatpush.msra.mxu0 %v219
    %289 = vmatmul.f32.gmra.mxu0 %v136
    %v290 = vpop.f32.mrf.mxu0
    %v291 = vadd.f32 0.0, %v290
    %292 = vmatmul.f32.gmra.mxu0 %v137
    %v293 = vpop.f32.mrf.mxu0
    %v294 = vadd.f32 0.0, %v293
    %295 = vdwg.mxu0
    %v296 = vld [vmem:[#allocation11] sm:$0xff]
    %v297 = vld [vmem:[#allocation11 + $0x8] sm:$0xff]
    %v298 = vld [vmem:[#allocation11 + $0x10] sm:$0xff]
    %v299 = vld [vmem:[#allocation11 + $0x18] sm:$0xff]
    %v300 = vld [vmem:[#allocation11 + $0x20] sm:$0xff]
    %v301 = vld [vmem:[#allocation11 + $0x28] sm:$0xff]
    %v302 = vld [vmem:[#allocation11 + $0x30] sm:$0xff]
    %v303 = vld [vmem:[#allocation11 + $0x38] sm:$0xff]
    %v304 = vld [vmem:[#allocation11 + $0x40] sm:$0xff]
    %v305 = vld [vmem:[#allocation11 + $0x48] sm:$0xff]
    %v306 = vld [vmem:[#allocation11 + $0x50] sm:$0xff]
    %v307 = vld [vmem:[#allocation11 + $0x58] sm:$0xff]
    %v308 = vld [vmem:[#allocation11 + $0x60] sm:$0xff]
    %v309 = vld [vmem:[#allocation11 + $0x68] sm:$0xff]
    %v310 = vld [vmem:[#allocation11 + $0x70] sm:$0xff]
    %v311 = vld [vmem:[#allocation11 + $0x78] sm:$0xff]
    %v312 = vld [vmem:[#allocation11 + $0x80] sm:$0xff]
    %v313 = vld [vmem:[#allocation11 + $0x88] sm:$0xff]
    %v314 = vld [vmem:[#allocation11 + $0x90] sm:$0xff]
    %v315 = vld [vmem:[#allocation11 + $0x98] sm:$0xff]
    %v316 = vld [vmem:[#allocation11 + $0xa0] sm:$0xff]
    %v317 = vld [vmem:[#allocation11 + $0xa8] sm:$0xff]
    %v318 = vld [vmem:[#allocation11 + $0xb0] sm:$0xff]
    %v319 = vld [vmem:[#allocation11 + $0xb8] sm:$0xff]
    %v320 = vld [vmem:[#allocation11 + $0xc0] sm:$0xff]
    %v321 = vld [vmem:[#allocation11 + $0xc8] sm:$0xff]
    %v322 = vld [vmem:[#allocation11 + $0xd0] sm:$0xff]
    %v323 = vld [vmem:[#allocation11 + $0xd8] sm:$0xff]
    %v324 = vld [vmem:[#allocation11 + $0xe0] sm:$0xff]
    %v325 = vld [vmem:[#allocation11 + $0xe8] sm:$0xff]
    %v326 = vld [vmem:[#allocation11 + $0xf0] sm:$0xff]
    %v327 = vld [vmem:[#allocation11 + $0xf8] sm:$0xff]
    %328 = vmatpush.msra.mxu0 %v326
    %329 = vmatpush.msra.mxu0 %v324
    %330 = vmatpush.msra.mxu0 %v322
    %331 = vmatpush.msra.mxu0 %v320
    %332 = vmatpush.msra.mxu0 %v318
    %333 = vmatpush.msra.mxu0 %v316
    %334 = vmatpush.msra.mxu0 %v314
    %335 = vmatpush.msra.mxu0 %v312
    %336 = vmatpush.msra.mxu0 %v310
    %337 = vmatpush.msra.mxu0 %v308
    %338 = vmatpush.msra.mxu0 %v306
    %339 = vmatpush.msra.mxu0 %v304
    %340 = vmatpush.msra.mxu0 %v302
    %341 = vmatpush.msra.mxu0 %v300
    %342 = vmatpush.msra.mxu0 %v298
    %343 = vmatpush.msra.mxu0 %v296
    %344 = vmatmul.f32.gmra.mxu0 %v138
    %v345 = vpop.f32.mrf.mxu0
    %v346 = vadd.f32 0.0, %v345
    %347 = vmatmul.f32.gmra.mxu0 %v139
    %v348 = vpop.f32.mrf.mxu0
    %v349 = vadd.f32 0.0, %v348
    %350 = vdwg.mxu0
    %351 = vmatpush.msra.mxu0 %v327
    %352 = vmatpush.msra.mxu0 %v325
    %353 = vmatpush.msra.mxu0 %v323
    %354 = vmatpush.msra.mxu0 %v321
    %355 = vmatpush.msra.mxu0 %v319
    %356 = vmatpush.msra.mxu0 %v317
    %357 = vmatpush.msra.mxu0 %v315
    %358 = vmatpush.msra.mxu0 %v313
    %359 = vmatpush.msra.mxu0 %v311
    %360 = vmatpush.msra.mxu0 %v309
    %361 = vmatpush.msra.mxu0 %v307
    %362 = vmatpush.msra.mxu0 %v305
    %363 = vmatpush.msra.mxu0 %v303
    %364 = vmatpush.msra.mxu0 %v301
    %365 = vmatpush.msra.mxu0 %v299
    %366 = vmatpush.msra.mxu0 %v297
    %367 = vmatmul.f32.gmra.mxu0 %v138
    %v368 = vpop.f32.mrf.mxu0
    %v369 = vadd.f32 0.0, %v368
    %370 = vmatmul.f32.gmra.mxu0 %v139
    %v371 = vpop.f32.mrf.mxu0
    %v372 = vadd.f32 0.0, %v371
    %373 = vdwg.mxu0
    %v374 = vld [vmem:[#allocation13] sm:$0xff]
    %v375 = vadd.f32 %v268, %v190
    %v376 = vadd.f32 %v271, %v193
    %v377 = vperm.slane %v374, 0
    %v378 = vadd.f32 %v375, %v377
    %v379 = vadd.f32 %v376, %v377
    %v380 = vmax.f32 %v378, 0.0
    %v381 = vmax.f32 %v379, 0.0
    %v382 = vadd.f32 %v346, %v213
    %v383 = vadd.f32 %v349, %v216
    %v384 = vperm.slane %v374, 1
    %v385 = vadd.f32 %v382, %v384
    %v386 = vadd.f32 %v383, %v384
    %v387 = vmax.f32 %v385, 0.0
    %v388 = vmax.f32 %v386, 0.0
    %v389 = vperm.slane %v374, 2
    %v390 = vadd.f32 %v291, %v389
    %v391 = vadd.f32 %v294, %v389
    %v392 = vmul.f32 %v380, %v390
    %v393 = vmul.f32 %v381, %v391
    %v394 = vperm.slane %v374, 3
    %v395 = vadd.f32 %v369, %v394
    %v396 = vadd.f32 %v372, %v394
    %v397 = vmul.f32 %v387, %v395
    %v398 = vmul.f32 %v388, %v396
    %v399 = vadd.f32 %v392, %v397
    %v400 = vadd.f32 %v393, %v398
    %v401 = vmul.f32 %v134, %v134
    %v402 = vmul.f32 %v135, %v135
    %403 = vadd.xlane.f32.xlu0 %v401
    %v404 = vpop.xlane.xlu0 %403
    %405 = vadd.xlane.f32.xlu0 %v402
    %v406 = vpop.xlane.xlu0 %405
    %v407 = vrsqrt.pop %v404
    %v408 = vmul.f32 %v407, %v404
    %v409 = vmul.f32 %v408, %v407
    %v410 = vmul.f32 0.5, %v409
    %v411 = vsub.f32 1.5, %v410
    %v412 = vmul.f32 %v407, %v411
    %v413 = vmul.f32 %v404, %v412
    %vm414 = vcmp.eq.f32.partialorder %v404, inf
    %v415 = vsel %vm414, %v404, %v413
    %vm416 = vcmp.eq.f32.partialorder %v404, 0.0
    %v417 = vand.u32 %v404, 2147483648
    %v418 = vsel %vm416, %v417, %v415
    %v419 = vrsqrt.pop %v406
    %v420 = vmul.f32 %v419, %v406
    %v421 = vmul.f32 %v420, %v419
    %v422 = vmul.f32 0.5, %v421
    %v423 = vsub.f32 1.5, %v422
    %v424 = vmul.f32 %v419, %v423
    %v425 = vmul.f32 %v406, %v424
    %vm426 = vcmp.eq.f32.partialorder %v406, inf
    %v427 = vsel %vm426, %v406, %v425
    %vm428 = vcmp.eq.f32.partialorder %v406, 0.0
    %v429 = vand.u32 %v406, 2147483648
    %v430 = vsel %vm428, %v429, %v427
    %v431 = vmul.f32 %v399, %v399
    %v432 = vmul.f32 %v400, %v400
    %433 = vadd.xlane.f32.xlu0 %v431
    %v434 = vpop.xlane.xlu0 %433
    %435 = vadd.xlane.f32.xlu0 %v432
    %v436 = vpop.xlane.xlu0 %435
    %v437 = vrsqrt.pop %v434
    %v438 = vmul.f32 %v437, %v434
    %v439 = vmul.f32 %v438, %v437
    %v440 = vmul.f32 0.5, %v439
    %v441 = vsub.f32 1.5, %v440
    %v442 = vmul.f32 %v437, %v441
    %v443 = vmul.f32 %v434, %v442
    %vm444 = vcmp.eq.f32.partialorder %v434, inf
    %v445 = vsel %vm444, %v434, %v443
    %vm446 = vcmp.eq.f32.partialorder %v434, 0.0
    %v447 = vand.u32 %v434, 2147483648
    %v448 = vsel %vm446, %v447, %v445
    %v449 = vrsqrt.pop %v436
    %v450 = vmul.f32 %v449, %v436
    %v451 = vmul.f32 %v450, %v449
    %v452 = vmul.f32 0.5, %v451
    %v453 = vsub.f32 1.5, %v452
    %v454 = vmul.f32 %v449, %v453
    %v455 = vmul.f32 %v436, %v454
    %vm456 = vcmp.eq.f32.partialorder %v436, inf
    %v457 = vsel %vm456, %v436, %v455
    %vm458 = vcmp.eq.f32.partialorder %v436, 0.0
    %v459 = vand.u32 %v436, 2147483648
    %v460 = vsel %vm458, %v459, %v457
    %vm461 = vcmp.eq.f32.partialorder %v448, 0.0
    %vm462 = vcmp.eq.f32.partialorder %v460, 0.0
    %v463 = vsel %vm461, 1.0, %v448
    %v464 = vsel %vm462, 1.0, %v460
    %v465 = vadd.f32 %v463, 1e-06
    %v466 = vadd.f32 %v464, 1e-06
    %v467 = vrcp.pop %v465
    %v468 = vmul.f32 %v465, %v467
    %v469 = vsub.f32 1.0, %v468
    %v470 = vmul.f32 %v467, %v469
    %v471 = vadd.f32 %v467, %v470
    %vm472 = vweird.f32 %v465
    %vm473 = vweird.f32 %v467
    %vm474 = vmor %vm472, %vm473
    %v475 = vsel %vm474, %v467, %v471
    %v476 = vand.u32 2147483647, %v465
    %vm477 = vcmp.eq.f32.partialorder %v476, 8.507059e+37
    %v478 = vand.u32 %v465, 2147483648
    %v479 = vor.u32 1.1754944e-38, %v478
    %v480 = vsel %vm477, %v479, %v475
    %v481 = vmul.f32 %v418, %v480
    %v482 = vrcp.pop %v466
    %v483 = vmul.f32 %v466, %v482
    %v484 = vsub.f32 1.0, %v483
    %v485 = vmul.f32 %v482, %v484
    %v486 = vadd.f32 %v482, %v485
    %vm487 = vweird.f32 %v466
    %vm488 = vweird.f32 %v482
    %vm489 = vmor %vm487, %vm488
    %v490 = vsel %vm489, %v482, %v486
    %v491 = vand.u32 2147483647, %v466
    %vm492 = vcmp.eq.f32.partialorder %v491, 8.507059e+37
    %v493 = vand.u32 %v466, 2147483648
    %v494 = vor.u32 1.1754944e-38, %v493
    %v495 = vsel %vm492, %v494, %v490
    %v496 = vmul.f32 %v430, %v495
    %v497 = vmul.f32 %v481, 0.5
    %v498 = vmul.f32 %v496, 0.5
    %v499 = vmin.f32 %v497, 1.0
    %v500 = vmin.f32 %v498, 1.0
    %v501 = vmul.f32 %v499, %v399
    %v502 = vmul.f32 %v500, %v400
    %v503 = vadd.f32 %v501, %v134
    %v504 = vadd.f32 %v502, %v135
    %505 = vadd.xlane.f32.xlu0 %v503
    %v506 = vpop.xlane.xlu0 %505
    %507 = vadd.xlane.f32.xlu0 %v504
    %v508 = vpop.xlane.xlu0 %507
    %v509 = vmul.f32 %v503, %v503
    %v510 = vmul.f32 %v504, %v504
    %511 = vadd.xlane.f32.xlu0 %v509
    %v512 = vpop.xlane.xlu0 %511
    %513 = vadd.xlane.f32.xlu0 %v510
    %v514 = vpop.xlane.xlu0 %513
    %v515 = vmul.f32 %v506, 0.03125
    %v516 = vmul.f32 %v508, 0.03125
    %v517 = vmul.f32 %v512, 0.03125
    %v518 = vmul.f32 %v514, 0.03125
    %v519 = vmul.f32 %v515, %v515
    %v520 = vmul.f32 %v516, %v516
    %v521 = vsub.f32 %v517, %v519
    %v522 = vsub.f32 %v518, %v520
    %v523 = vsub.f32 %v503, %v515
    %v524 = vsub.f32 %v504, %v516
    %v525 = vadd.f32 %v521, 1e-05
    %v526 = vadd.f32 %v522, 1e-05
    %v527 = vrsqrt.pop %v525
    %v528 = vmul.f32 %v527, %v525
    %v529 = vmul.f32 %v528, %v527
    %v530 = vmul.f32 0.5, %v529
    %v531 = vsub.f32 1.5, %v530
    %v532 = vmul.f32 %v527, %v531
    %vm533 = vweird.f32 %v525
    %vm534 = vweird.f32 %v527
    %vm535 = vmor %vm533, %vm534
    %v536 = vsel %vm535, %v527, %v532
    %v537 = vrsqrt.pop %v526
    %v538 = vmul.f32 %v537, %v526
    %v539 = vmul.f32 %v538, %v537
    %v540 = vmul.f32 0.5, %v539
    %v541 = vsub.f32 1.5, %v540
    %v542 = vmul.f32 %v537, %v541
    %vm543 = vweird.f32 %v526
    %vm544 = vweird.f32 %v537
    %vm545 = vmor %vm543, %vm544
    %v546 = vsel %vm545, %v537, %v542
    %v547 = vmul.f32 %v523, %v536
    %v548 = vmul.f32 %v524, %v546
    %v549 = vperm.slane %v374, 4
    %v550 = vmul.f32 %v547, %v549
    %v551 = vmul.f32 %v548, %v549
    %v552 = vperm.slane %v374, 5
    %v553 = vadd.f32 %v550, %v552
    %v554 = vadd.f32 %v551, %v552
    %555 = vst [vmem:[#allocation14] sm:$0xff] %v553
    %556 = vst [vmem:[#allocation14 + $0x8] sm:$0xff] %v554
    // Predicated region
    $region58: #{tpu_custom_call.1} parent=1 // pred_check
      _
    $region59: #{tpu_custom_call.1} parent=1 // pred_check_branch
      %558 = sbr.rel (0) target = $region61
    $region60: #{tpu_custom_call.1} parent=1 // pred_region
      %560 = vsyncadd [#allocation4], 0
      %s561 = sshll.u32 [#allocation14], 4
      %s562 = int_to_ptr.vmem [resolvable:$true] %s561
      %s563 = sshll.u32 %s7, 4
      %s564 = int_to_ptr.hbm [resolvable:$true] %s563
      %569 = dma.vmem_to_hbm [thread:$0]  %s562, 256, %s564, [#allocation4], 128, 128, 8
    $region61: #{tpu_custom_call.1} parent=1 // pred_fallthru
      _
    // Predicated region
    $region62: #{tpu_custom_call.1} parent=1 // pred_check
      _
    $region63: #{tpu_custom_call.1} parent=1 // pred_check_branch
      %571 = sbr.rel (0) target = $region65
    $region64: #{tpu_custom_call.1} parent=1 // pred_region
      %573 = dma.done [#allocation4], 256
    $region65: #{tpu_custom_call.1} parent=1 // pred_fallthru
      _
    %574 = vsyncpa [#allocation3], 1
    %575 = vsyncpa [#allocation6], 1
    %576 = vsyncpa [#allocation9], 1
    %577 = vsyncpa [#allocation12], 1
    %578 = vsyncpa [#allocation4], 1

</llo_original>
